<compile_context>
chip_gen: v7x
topology: tpu7x:2x2x1
jax: 0.10.0
libtpu: 0.0.40
codegen_flags: <defaults>
</compile_context>

<pallas_src>
import functools

import jax
import jax.numpy as jnp
from jax.experimental import pallas as pl
from jax.experimental.pallas import tpu as pltpu


def _shifted_relu_kernel(x_ref, o_ref, *, scale, shift):
    # Elementwise hot path on the VPU: relu -> scale -> shift.
    x = x_ref[...]
    y = jnp.maximum(x, 0.0) * scale + shift
    o_ref[...] = y.astype(o_ref.dtype)


def shifted_relu(
    x: jax.Array,
    shift: float = 0.0,
    scale: float = 1.0,
    *,
    lane_cols: int = 1024,   # lane-dense last dim, multiple of 128
    block_rows: int = 512,   # ~2 MiB f32 blocks (512 x 1024 x 4B)
) -> jax.Array:
    """max(x, 0) * scale + shift, any shape."""
    orig_shape = x.shape
    orig_dtype = x.dtype
    n = int(x.size)

    if n == 0:
        return jnp.zeros(orig_shape, orig_dtype)

    # Flatten to 1D and pad up to a lane-dense (rows, lane_cols) slab with
    # rows a multiple of 8 (sublane alignment).
    flat = x.reshape(-1)
    cols = lane_cols
    rows = pl.cdiv(n, cols)
    rows = 8 * pl.cdiv(rows, 8)
    padded = rows * cols
    if padded != n:
        flat = jnp.pad(flat, (0, padded - n))
    x2d = flat.reshape(rows, cols)

    # Tile over rows; each block sees the full (lane-dense) last dimension.
    tr = min(block_rows, rows)
    grid = (pl.cdiv(rows, tr),)

    kernel = functools.partial(_shifted_relu_kernel, scale=scale, shift=shift)

    itemsize = jnp.dtype(orig_dtype).itemsize
    cost = pl.CostEstimate(
        flops=3 * padded,                     # max, mul, add per element
        transcendentals=0,
        bytes_accessed=2 * padded * itemsize,  # read + write
    )

    out2d = pl.pallas_call(
        kernel,
        out_shape=jax.ShapeDtypeStruct((rows, cols), orig_dtype),
        grid_spec=pltpu.PrefetchScalarGridSpec(
            num_scalar_prefetch=0,
            grid=grid,
            in_specs=[pl.BlockSpec((tr, cols), lambda i: (i, 0))],
            out_specs=pl.BlockSpec((tr, cols), lambda i: (i, 0)),
        ),
        compiler_params=pltpu.CompilerParams(
            dimension_semantics=("parallel",),
            # 4 x block_bytes (in + out, double-buffered) stays well under
            # this on every generation (v5e/v6e/v7x).
            vmem_limit_bytes=32 * 1024 * 1024,
        ),
        cost_estimate=cost,
    )(x2d)

    # Strip padding and restore the original shape.
    return out2d.reshape(-1)[:n].reshape(orig_shape)


if __name__ == "__main__":
    key = jax.random.PRNGKey(0)
    # Small NCHW-style input, consistent with typical conv-layer activations.
    x = jax.random.normal(key, (2, 4, 16, 16), dtype=jnp.float32)

    # Default module parameters: shift=0, scale=1 (plain ReLU).
    out = jax.block_until_ready(shifted_relu(x))
    ref = jnp.maximum(x, 0.0)
    assert out.shape == x.shape
    assert out.dtype == x.dtype
    assert jnp.allclose(out, ref, atol=1e-6, rtol=1e-6)

    # Non-default shift/scale to exercise the full forward semantics.
    out2 = jax.block_until_ready(shifted_relu(x, shift=0.5, scale=2.0))
    ref2 = jnp.maximum(x, 0.0) * 2.0 + 0.5
    assert jnp.allclose(out2, ref2, atol=1e-6, rtol=1e-6)

    print("KERNEL_OK")
</pallas_src>

<mosaic_0001>
module attributes {stable_mosaic.version = 11 : i64} {
  func.func @_shifted_relu_kernel(%arg0: i32, %arg1: memref<8x1024xf32, #tpu.memory_space<vmem>>, %arg2: memref<8x1024xf32, #tpu.memory_space<vmem>>) attributes {dimension_semantics = [#tpu.dimension_semantics<parallel>], iteration_bounds = array<i64: 1>, scalar_prefetch = 0 : i64, scratch_operands = 0 : i64, tpu.core_type = #tpu.core_type<tc>, window_params = [{transform_indices = @transform_0, window_bounds = array<i64: 8, 1024>}, {transform_indices = @transform_1, window_bounds = array<i64: 8, 1024>}]} {
    %c0 = arith.constant 0 : index
    %c0_0 = arith.constant 0 : index
    %0 = vector.load %arg1[%c0, %c0_0] : memref<8x1024xf32, #tpu.memory_space<vmem>>, vector<8x1024xf32>
    %cst = arith.constant 0.000000e+00 : f32
    %1 = vector.broadcast %cst : f32 to vector<8x1024xf32>
    %2 = arith.maximumf %0, %1 : vector<8x1024xf32>
    %cst_1 = arith.constant 1.000000e+00 : f32
    %3 = vector.broadcast %cst_1 : f32 to vector<8x1024xf32>
    %4 = arith.mulf %2, %3 : vector<8x1024xf32>
    %cst_2 = arith.constant 0.000000e+00 : f32
    %5 = vector.broadcast %cst_2 : f32 to vector<8x1024xf32>
    %6 = arith.addf %4, %5 : vector<8x1024xf32>
    %c0_3 = arith.constant 0 : index
    %c0_4 = arith.constant 0 : index
    %7 = vector.load %arg2[%c0_3, %c0_4] : memref<8x1024xf32, #tpu.memory_space<vmem>>, vector<8x1024xf32>
    tpu.vector_store %arg2[%c0_3, %c0_4], %6 {strides = array<i32>} : memref<8x1024xf32, #tpu.memory_space<vmem>>, vector<8x1024xf32>,
    return
  }
  func.func @transform_0(%arg0: i32) -> (i32, i32) {
    %c0_i32 = arith.constant 0 : i32
    %c0_i32_0 = arith.constant 0 : i32
    return %arg0, %c0_i32 : i32, i32
  }
  func.func @transform_1(%arg0: i32) -> (i32, i32) {
    %c0_i32 = arith.constant 0 : i32
    %c0_i32_0 = arith.constant 0 : i32
    return %arg0, %c0_i32 : i32, i32
  }
}

</mosaic_0001>

<llo_original>
// kernel: tpu_custom_call.1
$region0: #{tpu_custom_call.1}
  #allocation0 [shape = 'u32[]', space=smem, size = 0x4, offset = 0x4, fixed_abs, tag = 'smem constant byte address 0x4 - core index']
  #allocation1 [shape = 'u32[144,128]{1,0:T(1,128)}', space=vmem, size = 0x12000, scoped, tag = 'internal scratch']
  %s0 = inlined_call_operand.hbm [shape: f32[8,1024], index: 0, kind: input, shape index: {}]
  %s1 = inlined_call_operand.hbm [shape: f32[8,1024], index: 1, kind: output, shape index: {}]
  %s2 = sld [smem:[#allocation0]]
  $region18: #{tpu_custom_call.1} parent=0
    _
  %s4 = ssub.s32 1, %s2
  %s5 = scalar_select 0, %s4, %s2
  $region1: #{tpu_custom_call.1} parent=0
    #allocation2 [shape = 'u8[32768]{0}', space=vmem, size = 0x8000, scoped, tag = 'input window, operand 0, single buffered']
    #allocation3 [shape = 's32[1]{0}', space=sflag, size = 0x4, scoped, tag = 'scoped memory for tpu_custom_call.1']
    #allocation4 [shape = 's32[1]{0}', space=sflag, size = 0x4, scoped, tag = 'scoped memory for tpu_custom_call.1']
    #allocation5 [shape = 'u8[32768]{0}', space=vmem, size = 0x8000, scoped, tag = 'output window, operand 0, single buffered']
    %6 = vsyncpa [#allocation3], 0
    %7 = vsyncpa [#allocation4], 0
    // Predicated region
    $region2: #{tpu_custom_call.1} parent=1 // pred_check
      _
    $region3: #{tpu_custom_call.1} parent=1 // pred_check_branch
      %9 = sbr.rel (0) target = $region5
    $region4: #{tpu_custom_call.1} parent=1 // pred_region
      %s11 = ssub.s32 1024, 1024
      %12 = vsyncadd [#allocation3], %s11
      %s14 = sshll.u32 [#allocation2], 4
      %s15 = int_to_ptr.vmem [resolvable:$true] %s14
      %17 = dma.hbm_to_vmem [thread:$0]  %s0, 1024, %s15, [#allocation3]
    $region5: #{tpu_custom_call.1} parent=1 // pred_fallthru
      _
    // Predicated region
    $region6: #{tpu_custom_call.1} parent=1 // pred_check
      _
    $region7: #{tpu_custom_call.1} parent=1 // pred_check_branch
      %19 = sbr.rel (0) target = $region9
    $region8: #{tpu_custom_call.1} parent=1 // pred_region
      %20 = dma.done [#allocation3], 1024
    $region9: #{tpu_custom_call.1} parent=1 // pred_fallthru
      _
    %v21 = vld [vmem:[#allocation2] sm:$0xff]
    %v22 = vld [vmem:[#allocation2 + $0x8] sm:$0xff]
    %v23 = vld [vmem:[#allocation2 + $0x10] sm:$0xff]
    %v24 = vld [vmem:[#allocation2 + $0x18] sm:$0xff]
    %v25 = vld [vmem:[#allocation2 + $0x20] sm:$0xff]
    %v26 = vld [vmem:[#allocation2 + $0x28] sm:$0xff]
    %v27 = vld [vmem:[#allocation2 + $0x30] sm:$0xff]
    %v28 = vld [vmem:[#allocation2 + $0x38] sm:$0xff]
    %v29 = vmax.f32 %v21, 0.0
    %v30 = vmax.f32 %v22, 0.0
    %v31 = vmax.f32 %v23, 0.0
    %v32 = vmax.f32 %v24, 0.0
    %v33 = vmax.f32 %v25, 0.0
    %v34 = vmax.f32 %v26, 0.0
    %v35 = vmax.f32 %v27, 0.0
    %v36 = vmax.f32 %v28, 0.0
    %v37 = vadd.f32 %v29, 0.0
    %v38 = vadd.f32 %v30, 0.0
    %v39 = vadd.f32 %v31, 0.0
    %v40 = vadd.f32 %v32, 0.0
    %v41 = vadd.f32 %v33, 0.0
    %v42 = vadd.f32 %v34, 0.0
    %v43 = vadd.f32 %v35, 0.0
    %v44 = vadd.f32 %v36, 0.0
    %45 = vst [vmem:[#allocation5] sm:$0xff] %v37
    %46 = vst [vmem:[#allocation5 + $0x8] sm:$0xff] %v38
    %47 = vst [vmem:[#allocation5 + $0x10] sm:$0xff] %v39
    %48 = vst [vmem:[#allocation5 + $0x18] sm:$0xff] %v40
    %49 = vst [vmem:[#allocation5 + $0x20] sm:$0xff] %v41
    %50 = vst [vmem:[#allocation5 + $0x28] sm:$0xff] %v42
    %51 = vst [vmem:[#allocation5 + $0x30] sm:$0xff] %v43
    %52 = vst [vmem:[#allocation5 + $0x38] sm:$0xff] %v44
    // Predicated region
    $region10: #{tpu_custom_call.1} parent=1 // pred_check
      _
    $region11: #{tpu_custom_call.1} parent=1 // pred_check_branch
      %54 = sbr.rel (0) target = $region13
    $region12: #{tpu_custom_call.1} parent=1 // pred_region
      %s56 = ssub.s32 1024, 1024
      %57 = vsyncadd [#allocation4], %s56
      %s59 = sshll.u32 [#allocation5], 4
      %s60 = int_to_ptr.vmem [resolvable:$true] %s59
      %62 = dma.vmem_to_hbm [thread:$0]  %s60, 1024, %s1, [#allocation4]
    $region13: #{tpu_custom_call.1} parent=1 // pred_fallthru
      _
    // Predicated region
    $region14: #{tpu_custom_call.1} parent=1 // pred_check
      _
    $region15: #{tpu_custom_call.1} parent=1 // pred_check_branch
      %64 = sbr.rel (0) target = $region17
    $region16: #{tpu_custom_call.1} parent=1 // pred_region
      %65 = dma.done [#allocation4], 1024
    $region17: #{tpu_custom_call.1} parent=1 // pred_fallthru
      _
    %66 = vsyncpa [#allocation3], 1
    %67 = vsyncpa [#allocation4], 1

</llo_original>
